<compile_context>
chip_gen: v5e
topology: v5e:2x2
jax: 0.10.0
libtpu: 0.0.40
codegen_flags: <defaults>
</compile_context>

<pallas_src>
import functools
import math

import jax
import jax.numpy as jnp
from jax import lax
from jax.experimental import pallas as pl
from jax.experimental.pallas import tpu as pltpu

HIDDEN = 256            # hidden width of both Linear layers (fixed by module)
SUB = 128               # rows per inner sub-tile (h1/h2 stay at 32 vregs each)
MAX_SUB_PER_TILE = 4    # batch tile capped at 512 rows
LANE = 128              # output lane padding (dense, unmasked stores)


def _actor_kernel(x_ref, w1_ref, b1_ref, w2_ref, b2_ref, w3_ref, b3_ref,
                  o_ref, *, n_sub):
    """One grid step = n_sub sub-tiles of SUB rows; weights stay resident."""
    w1 = w1_ref[...]
    b1 = b1_ref[...]
    w2 = w2_ref[...]
    b2 = b2_ref[...]
    w3 = w3_ref[...]
    b3 = b3_ref[...]

    def body(s, carry):
        r = pl.multiple_of(s * SUB, SUB)
        x = x_ref[pl.ds(r, SUB), :].astype(jnp.bfloat16)
        # Layer 1: Linear + ReLU (bf16 x bf16 -> f32 accumulate on the MXU)
        h1 = jnp.dot(x, w1, preferred_element_type=jnp.float32)
        h1 = jnp.maximum(h1 + b1, 0.0)
        # Layer 2: Linear + ReLU
        h2 = jnp.dot(h1.astype(jnp.bfloat16), w2,
                     preferred_element_type=jnp.float32)
        h2 = jnp.maximum(h2 + b2, 0.0)
        # Layer 3: Linear + tanh (tanh in f32 on the EUP), store bf16
        out = jnp.dot(h2.astype(jnp.bfloat16), w3,
                      preferred_element_type=jnp.float32)
        o_ref[pl.ds(r, SUB), :] = jnp.tanh(out + b3).astype(o_ref.dtype)
        return carry

    lax.fori_loop(0, n_sub, body, 0, unroll=True)


def prepare_params(params):
    """One-time weight prep (NOT per forward call).

    Casts the matmul operands to bf16 and lane-pads the output layer to a
    multiple of 128.  Call this once after initialization / each optimizer
    step and reuse the result for every forward.
    """
    w3 = params["w3"].astype(jnp.bfloat16)
    b3 = params["b3"].astype(jnp.float32)
    action_dim = w3.shape[1]
    n_out = max(LANE, pl.cdiv(action_dim, LANE) * LANE)
    pad_n = n_out - action_dim
    if pad_n:
        w3 = jnp.pad(w3, ((0, 0), (0, pad_n)))   # tanh(0)=0 in discarded lanes
        b3 = jnp.pad(b3, ((0, 0), (0, pad_n)))
    return {
        "w1": params["w1"].astype(jnp.bfloat16),
        "b1": params["b1"].astype(jnp.float32),
        "w2": params["w2"].astype(jnp.bfloat16),
        "b2": params["b2"].astype(jnp.float32),
        "w3": w3,
        "b3": b3,
    }


def ddpg_actor_forward(states, prep, action_dim):
    """states: (B, state_dim) f32. prep: output of prepare_params()."""
    w1, b1, w2, b2, w3, b3 = (
        prep["w1"], prep["b1"], prep["w2"], prep["b2"], prep["w3"], prep["b3"],
    )
    B, state_dim = states.shape
    hidden = w1.shape[1]
    n_out = w3.shape[1]

    # --- batch tiling --------------------------------------------------------
    # SUB-row sub-tiles; pack up to MAX_SUB_PER_TILE of them per grid tile, but
    # keep >=2 grid tiles whenever B > SUB so v7x's 2 TCs both get work.
    n_sub_total = pl.cdiv(B, SUB)
    sub_per_tile = min(MAX_SUB_PER_TILE, max(1, -(-n_sub_total // 2)))
    tb = sub_per_tile * SUB
    n_tiles = pl.cdiv(n_sub_total, sub_per_tile)
    b_pad = n_tiles * tb

    x = states
    if b_pad != B:
        x = jnp.pad(x, ((0, b_pad - B), (0, 0)))

    kernel = functools.partial(_actor_kernel, n_sub=sub_per_tile)

    # --- BlockSpecs: batch-tiled activations, resident weights ---------------
    in_specs = [
        pl.BlockSpec((tb, state_dim), lambda i: (i, 0)),      # states tile
        pl.BlockSpec((state_dim, hidden), lambda i: (0, 0)),  # W1 (resident)
        pl.BlockSpec((1, hidden), lambda i: (0, 0)),          # b1
        pl.BlockSpec((hidden, hidden), lambda i: (0, 0)),     # W2
        pl.BlockSpec((1, hidden), lambda i: (0, 0)),          # b2
        pl.BlockSpec((hidden, n_out), lambda i: (0, 0)),      # W3 (padded)
        pl.BlockSpec((1, n_out), lambda i: (0, 0)),           # b3 (padded)
    ]
    out_spec = pl.BlockSpec((tb, n_out), lambda i: (i, 0))

    flops = 2 * b_pad * (state_dim * hidden + hidden * hidden + hidden * n_out)
    bytes_accessed = (
        b_pad * state_dim * 4                                          # states f32
        + (state_dim * hidden + hidden * hidden + hidden * n_out) * 2  # weights bf16
        + (2 * hidden + n_out) * 4                                     # biases f32
        + b_pad * n_out * 2                                            # output bf16
    )

    out = pl.pallas_call(
        kernel,
        out_shape=jax.ShapeDtypeStruct((b_pad, n_out), jnp.bfloat16),
        grid=(n_tiles,),
        in_specs=in_specs,
        out_specs=out_spec,
        compiler_params=pltpu.CompilerParams(
            dimension_semantics=("parallel",),   # v7x: shard batch over 2 TCs
            vmem_limit_bytes=8 << 20,
        ),
        cost_estimate=pl.CostEstimate(
            flops=flops,
            transcendentals=b_pad * n_out,
            bytes_accessed=bytes_accessed,
        ),
    )(x, w1, b1, w2, b2, w3, b3)

    # drop batch padding and lane padding; return f32 like the torch module
    return out[:B, :action_dim].astype(jnp.float32)


def init_params(key, state_dim, action_dim, hidden=HIDDEN):
    """Deterministic init mimicking PyTorch's default U(-1/sqrt(fan_in), +)."""
    ks = jax.random.split(key, 6)

    def uniform(k, shape, fan_in):
        bound = 1.0 / math.sqrt(fan_in)
        return jax.random.uniform(k, shape, jnp.float32, -bound, bound)

    return {
        # stored as (in, out) so the kernel computes x @ W + b
        "w1": uniform(ks[0], (state_dim, hidden), state_dim),
        "b1": uniform(ks[1], (1, hidden), state_dim),
        "w2": uniform(ks[2], (hidden, hidden), hidden),
        "b2": uniform(ks[3], (1, hidden), hidden),
        "w3": uniform(ks[4], (hidden, action_dim), hidden),
        "b3": uniform(ks[5], (1, action_dim), hidden),
    }


def reference_forward(states, p):
    h1 = jnp.maximum(states @ p["w1"] + p["b1"], 0.0)
    h2 = jnp.maximum(h1 @ p["w2"] + p["b2"], 0.0)
    return jnp.tanh(h2 @ p["w3"] + p["b3"])


if __name__ == "__main__":
    key = jax.random.PRNGKey(0)
    k_small, k_params, k_mid, k_big = jax.random.split(key, 4)

    state_dim, action_dim = 16, 8
    params = init_params(k_params, state_dim, action_dim)
    # One-time weight prep (bf16 cast + lane padding) — reused by every call.
    prep = jax.block_until_ready(prepare_params(params))

    # Small batch: padding 2 -> 128, single grid tile.
    s0 = jax.random.normal(k_small, (2, state_dim), jnp.float32)
    o0 = jax.block_until_ready(ddpg_actor_forward(s0, prep, action_dim))
    r0 = reference_forward(s0, params)
    assert o0.shape == (2, action_dim)
    assert jnp.allclose(o0, r0, atol=3e-2, rtol=3e-2)

    # Non-divisible batch: 200 -> 2 grid tiles of 128 rows (both TCs on v7x).
    s1 = jax.random.normal(k_mid, (200, state_dim), jnp.float32)
    o1 = jax.block_until_ready(ddpg_actor_forward(s1, prep, action_dim))
    r1 = reference_forward(s1, params)
    assert o1.shape == (200, action_dim)
    assert jnp.allclose(o1, r1, atol=3e-2, rtol=3e-2)

    # Larger batch: 600 -> 2 grid tiles of 384 rows (inner 3-step sub-tile loop).
    s2 = jax.random.normal(k_big, (600, state_dim), jnp.float32)
    o2 = jax.block_until_ready(ddpg_actor_forward(s2, prep, action_dim))
    r2 = reference_forward(s2, params)
    assert o2.shape == (600, action_dim)
    assert jnp.allclose(o2, r2, atol=3e-2, rtol=3e-2)

    print("KERNEL_OK")
</pallas_src>

<mosaic_0001>
module attributes {stable_mosaic.version = 11 : i64} {
  func.func @_actor_kernel(%arg0: i32, %arg1: memref<128x16xf32, #tpu.memory_space<vmem>>, %arg2: memref<16x256xbf16, #tpu.memory_space<vmem>>, %arg3: memref<1x256xf32, #tpu.memory_space<vmem>>, %arg4: memref<256x256xbf16, #tpu.memory_space<vmem>>, %arg5: memref<1x256xf32, #tpu.memory_space<vmem>>, %arg6: memref<256x128xbf16, #tpu.memory_space<vmem>>, %arg7: memref<1x128xf32, #tpu.memory_space<vmem>>, %arg8: memref<128x128xbf16, #tpu.memory_space<vmem>>) attributes {dimension_semantics = [#tpu.dimension_semantics<parallel>], iteration_bounds = array<i64: 1>, scalar_prefetch = 0 : i64, scratch_operands = 0 : i64, tpu.core_type = #tpu.core_type<tc>, window_params = [{transform_indices = @transform_0, window_bounds = array<i64: 128, 16>}, {pipeline_mode = #tpu.pipeline_mode<synchronous>, transform_indices = @transform_1, window_bounds = array<i64: 16, 256>}, {pipeline_mode = #tpu.pipeline_mode<synchronous>, transform_indices = @transform_2, window_bounds = array<i64: 1, 256>}, {pipeline_mode = #tpu.pipeline_mode<synchronous>, transform_indices = @transform_3, window_bounds = array<i64: 256, 256>}, {pipeline_mode = #tpu.pipeline_mode<synchronous>, transform_indices = @transform_4, window_bounds = array<i64: 1, 256>}, {pipeline_mode = #tpu.pipeline_mode<synchronous>, transform_indices = @transform_5, window_bounds = array<i64: 256, 128>}, {pipeline_mode = #tpu.pipeline_mode<synchronous>, transform_indices = @transform_6, window_bounds = array<i64: 1, 128>}, {transform_indices = @transform_7, window_bounds = array<i64: 128, 128>}]} {
    %c0 = arith.constant 0 : index
    %c0_0 = arith.constant 0 : index
    %0 = vector.load %arg2[%c0, %c0_0] : memref<16x256xbf16, #tpu.memory_space<vmem>>, vector<16x256xbf16>
    %c0_1 = arith.constant 0 : index
    %c0_2 = arith.constant 0 : index
    %1 = vector.load %arg3[%c0_1, %c0_2] : memref<1x256xf32, #tpu.memory_space<vmem>>, vector<1x256xf32>
    %c0_3 = arith.constant 0 : index
    %c0_4 = arith.constant 0 : index
    %2 = vector.load %arg4[%c0_3, %c0_4] : memref<256x256xbf16, #tpu.memory_space<vmem>>, vector<256x256xbf16>
    %c0_5 = arith.constant 0 : index
    %c0_6 = arith.constant 0 : index
    %3 = vector.load %arg5[%c0_5, %c0_6] : memref<1x256xf32, #tpu.memory_space<vmem>>, vector<1x256xf32>
    %c0_7 = arith.constant 0 : index
    %c0_8 = arith.constant 0 : index
    %4 = vector.load %arg6[%c0_7, %c0_8] : memref<256x128xbf16, #tpu.memory_space<vmem>>, vector<256x128xbf16>
    %c0_9 = arith.constant 0 : index
    %c0_10 = arith.constant 0 : index
    %5 = vector.load %arg7[%c0_9, %c0_10] : memref<1x128xf32, #tpu.memory_space<vmem>>, vector<1x128xf32>
    %c0_i32 = arith.constant 0 : i32
    %c128_i32 = arith.constant 128 : i32
    %6 = arith.muli %c0_i32, %c128_i32 : i32
    %7 = tpu.assume_multiple %6, 128 : i32
    %8 = arith.index_cast %7 : i32 to index
    %c0_11 = arith.constant 0 : index
    %9 = vector.load %arg1[%8, %c0_11] : memref<128x16xf32, #tpu.memory_space<vmem>>, vector<128x16xf32>
    %10 = arith.truncf %9 : vector<128x16xf32> to vector<128x16xbf16>
    %cst = arith.constant dense<0.000000e+00> : vector<128x256xf32>
    %11 = tpu.matmul %10, %0, %cst {dimension_numbers = #tpu.dot_dimension_numbers<[1], [0], [0], [1], [0, 0, 1, 1], [], []>} : vector<128x16xbf16>, vector<16x256xbf16>, vector<128x256xf32> -> vector<128x256xf32>
    %12 = vector.broadcast %1 : vector<1x256xf32> to vector<128x256xf32>
    %13 = arith.addf %11, %12 : vector<128x256xf32>
    %cst_12 = arith.constant 0.000000e+00 : f32
    %14 = vector.broadcast %cst_12 : f32 to vector<128x256xf32>
    %15 = arith.maximumf %13, %14 : vector<128x256xf32>
    %16 = arith.truncf %15 : vector<128x256xf32> to vector<128x256xbf16>
    %cst_13 = arith.constant dense<0.000000e+00> : vector<128x256xf32>
    %17 = tpu.matmul %16, %2, %cst_13 {dimension_numbers = #tpu.dot_dimension_numbers<[1], [0], [0], [1], [0, 0, 1, 1], [], []>} : vector<128x256xbf16>, vector<256x256xbf16>, vector<128x256xf32> -> vector<128x256xf32>
    %18 = vector.broadcast %3 : vector<1x256xf32> to vector<128x256xf32>
    %19 = arith.addf %17, %18 : vector<128x256xf32>
    %cst_14 = arith.constant 0.000000e+00 : f32
    %20 = vector.broadcast %cst_14 : f32 to vector<128x256xf32>
    %21 = arith.maximumf %19, %20 : vector<128x256xf32>
    %22 = arith.truncf %21 : vector<128x256xf32> to vector<128x256xbf16>
    %cst_15 = arith.constant dense<0.000000e+00> : vector<128x128xf32>
    %23 = tpu.matmul %22, %4, %cst_15 {dimension_numbers = #tpu.dot_dimension_numbers<[1], [0], [0], [1], [0, 0, 1, 1], [], []>} : vector<128x256xbf16>, vector<256x128xbf16>, vector<128x128xf32> -> vector<128x128xf32>
    %24 = vector.broadcast %5 : vector<1x128xf32> to vector<128x128xf32>
    %25 = arith.addf %23, %24 : vector<128x128xf32>
    %26 = math.tanh %25 : vector<128x128xf32>
    %27 = arith.truncf %26 : vector<128x128xf32> to vector<128x128xbf16>
    %28 = arith.index_cast %7 : i32 to index
    %c0_16 = arith.constant 0 : index
    %29 = vector.load %arg8[%28, %c0_16] : memref<128x128xbf16, #tpu.memory_space<vmem>>, vector<128x128xbf16>
    tpu.vector_store %arg8[%28, %c0_16], %27 {strides = array<i32>} : memref<128x128xbf16, #tpu.memory_space<vmem>>, vector<128x128xbf16>,
    %c1_i32 = arith.constant 1 : i32
    return
  }
  func.func @transform_0(%arg0: i32) -> (i32, i32) {
    %c0_i32 = arith.constant 0 : i32
    %c0_i32_0 = arith.constant 0 : i32
    return %arg0, %c0_i32 : i32, i32
  }
  func.func @transform_1(%arg0: i32) -> (i32, i32) {
    %c0_i32 = arith.constant 0 : i32
    %c0_i32_0 = arith.constant 0 : i32
    %c0_i32_1 = arith.constant 0 : i32
    return %c0_i32, %c0_i32_0 : i32, i32
  }
  func.func @transform_2(%arg0: i32) -> (i32, i32) {
    %c0_i32 = arith.constant 0 : i32
    %c0_i32_0 = arith.constant 0 : i32
    %c0_i32_1 = arith.constant 0 : i32
    return %c0_i32, %c0_i32_0 : i32, i32
  }
  func.func @transform_3(%arg0: i32) -> (i32, i32) {
    %c0_i32 = arith.constant 0 : i32
    %c0_i32_0 = arith.constant 0 : i32
    %c0_i32_1 = arith.constant 0 : i32
    return %c0_i32, %c0_i32_0 : i32, i32
  }
  func.func @transform_4(%arg0: i32) -> (i32, i32) {
    %c0_i32 = arith.constant 0 : i32
    %c0_i32_0 = arith.constant 0 : i32
    %c0_i32_1 = arith.constant 0 : i32
    return %c0_i32, %c0_i32_0 : i32, i32
  }
  func.func @transform_5(%arg0: i32) -> (i32, i32) {
    %c0_i32 = arith.constant 0 : i32
    %c0_i32_0 = arith.constant 0 : i32
    %c0_i32_1 = arith.constant 0 : i32
    return %c0_i32, %c0_i32_0 : i32, i32
  }
  func.func @transform_6(%arg0: i32) -> (i32, i32) {
    %c0_i32 = arith.constant 0 : i32
    %c0_i32_0 = arith.constant 0 : i32
    %c0_i32_1 = arith.constant 0 : i32
    return %c0_i32, %c0_i32_0 : i32, i32
  }
  func.func @transform_7(%arg0: i32) -> (i32, i32) {
    %c0_i32 = arith.constant 0 : i32
    %c0_i32_0 = arith.constant 0 : i32
    return %arg0, %c0_i32 : i32, i32
  }
}

</mosaic_0001>

<llo_original>
// kernel: tpu_custom_call.1
$region0: #{tpu_custom_call.1}
  #allocation0 [shape = 'u32[]', space=smem, size = 0x4, offset = 0x4, fixed_abs, tag = 'smem constant byte address 0x4 - core index']
  #allocation1 [shape = 'u32[72,128]{1,0:T(1,128)}', space=vmem, size = 0x9000, scoped, tag = 'internal scratch']
  %s0 = inlined_call_operand.vmem [shape: f32[128,16], index: 0, kind: input, shape index: {}]
  %s1 = inlined_call_operand.vmem [shape: bf16[16,256], index: 1, kind: input, shape index: {}]
  %s2 = inlined_call_operand.vmem [shape: f32[1,256], index: 2, kind: input, shape index: {}]
  %s3 = inlined_call_operand.hbm [shape: bf16[256,256], index: 3, kind: input, shape index: {}]
  %s4 = inlined_call_operand.vmem [shape: f32[1,256], index: 4, kind: input, shape index: {}]
  %s5 = inlined_call_operand.vmem [shape: bf16[256,128], index: 5, kind: input, shape index: {}]
  %s6 = inlined_call_operand.vmem [shape: f32[1,128], index: 6, kind: input, shape index: {}]
  %s7 = inlined_call_operand.hbm [shape: bf16[128,128], index: 7, kind: output, shape index: {}]
  %s8 = sld [smem:[#allocation0]]
  $region42: #{tpu_custom_call.1} parent=0
    _
  %s10 = ssub.s32 1, %s8
  %s11 = scalar_select 0, %s10, %s8
  $region1: #{tpu_custom_call.1} parent=0
    #allocation2 [shape = 'u8[131072]{0}', space=vmem, size = 0x20000, scoped, tag = 'input window, operand 3, single buffered']
    #allocation3 [shape = 's32[1]{0}', space=sflag, size = 0x4, scoped, tag = 'scoped memory for tpu_custom_call.1']
    #allocation4 [shape = 's32[1]{0}', space=sflag, size = 0x4, scoped, tag = 'scoped memory for tpu_custom_call.1']
    #allocation5 [shape = 'u8[32768]{0}', space=vmem, size = 0x8000, scoped, tag = 'output window, operand 0, single buffered']
    %12 = vsyncpa [#allocation3], 0
    %13 = vsyncpa [#allocation4], 0
    // Predicated region
    $region2: #{tpu_custom_call.1} parent=1 // pred_check
      _
    $region3: #{tpu_custom_call.1} parent=1 // pred_check_branch
      %15 = sbr.rel (0) target = $region5
    $region4: #{tpu_custom_call.1} parent=1 // pred_region
      _
    $region5: #{tpu_custom_call.1} parent=1 // pred_fallthru
      _
    // Predicated region
    $region6: #{tpu_custom_call.1} parent=1 // pred_check
      _
    $region7: #{tpu_custom_call.1} parent=1 // pred_check_branch
      %17 = sbr.rel (0) target = $region9
    $region8: #{tpu_custom_call.1} parent=1 // pred_region
      _
    $region9: #{tpu_custom_call.1} parent=1 // pred_fallthru
      _
    // Predicated region
    $region10: #{tpu_custom_call.1} parent=1 // pred_check
      _
    $region11: #{tpu_custom_call.1} parent=1 // pred_check_branch
      %19 = sbr.rel (0) target = $region13
    $region12: #{tpu_custom_call.1} parent=1 // pred_region
      _
    $region13: #{tpu_custom_call.1} parent=1 // pred_fallthru
      _
    // Predicated region
    $region14: #{tpu_custom_call.1} parent=1 // pred_check
      _
    $region15: #{tpu_custom_call.1} parent=1 // pred_check_branch
      %21 = sbr.rel (0) target = $region17
    $region16: #{tpu_custom_call.1} parent=1 // pred_region
      %23 = vsyncadd [#allocation3], 0
      %s24 = sshll.u32 %s3, 4
      %s25 = int_to_ptr.hbm [resolvable:$true] %s24
      %s26 = sshll.u32 [#allocation2], 4
      %s27 = int_to_ptr.vmem [resolvable:$true] %s26
      %32 = dma.hbm_to_vmem [thread:$0]  %s25, 4096, %s27, [#allocation3], 128, 128, 8
    $region17: #{tpu_custom_call.1} parent=1 // pred_fallthru
      _
    // Predicated region
    $region18: #{tpu_custom_call.1} parent=1 // pred_check
      _
    $region19: #{tpu_custom_call.1} parent=1 // pred_check_branch
      %34 = sbr.rel (0) target = $region21
    $region20: #{tpu_custom_call.1} parent=1 // pred_region
      _
    $region21: #{tpu_custom_call.1} parent=1 // pred_fallthru
      _
    // Predicated region
    $region22: #{tpu_custom_call.1} parent=1 // pred_check
      _
    $region23: #{tpu_custom_call.1} parent=1 // pred_check_branch
      %36 = sbr.rel (0) target = $region25
    $region24: #{tpu_custom_call.1} parent=1 // pred_region
      _
    $region25: #{tpu_custom_call.1} parent=1 // pred_fallthru
      _
    // Predicated region
    $region26: #{tpu_custom_call.1} parent=1 // pred_check
      _
    $region27: #{tpu_custom_call.1} parent=1 // pred_check_branch
      %38 = sbr.rel (0) target = $region29
    $region28: #{tpu_custom_call.1} parent=1 // pred_region
      _
    $region29: #{tpu_custom_call.1} parent=1 // pred_fallthru
      _
    // Predicated region
    $region30: #{tpu_custom_call.1} parent=1 // pred_check
      _
    $region31: #{tpu_custom_call.1} parent=1 // pred_check_branch
      %40 = sbr.rel (0) target = $region33
    $region32: #{tpu_custom_call.1} parent=1 // pred_region
      %42 = dma.done [#allocation3], 4096
    $region33: #{tpu_custom_call.1} parent=1 // pred_fallthru
      _
    %v44 = vld [vmem:[%s1] sm:$0xff]
    %v45 = vld [vmem:[%s1 + $0x8] sm:$0xff]
    %v46 = vld [vmem:[%s2] sm:$0x3]
    %v47 = vld [vmem:[#allocation2] sm:$0xff]
    %v48 = vld [vmem:[#allocation2 + $0x8] sm:$0xff]
    %v49 = vld [vmem:[#allocation2 + $0x10] sm:$0xff]
    %v50 = vld [vmem:[#allocation2 + $0x18] sm:$0xff]
    %v51 = vld [vmem:[#allocation2 + $0x20] sm:$0xff]
    %v52 = vld [vmem:[#allocation2 + $0x28] sm:$0xff]
    %v53 = vld [vmem:[#allocation2 + $0x30] sm:$0xff]
    %v54 = vld [vmem:[#allocation2 + $0x38] sm:$0xff]
    %v55 = vld [vmem:[#allocation2 + $0x40] sm:$0xff]
    %v56 = vld [vmem:[#allocation2 + $0x48] sm:$0xff]
    %v57 = vld [vmem:[#allocation2 + $0x50] sm:$0xff]
    %v58 = vld [vmem:[#allocation2 + $0x58] sm:$0xff]
    %v59 = vld [vmem:[#allocation2 + $0x60] sm:$0xff]
    %v60 = vld [vmem:[#allocation2 + $0x68] sm:$0xff]
    %v61 = vld [vmem:[#allocation2 + $0x70] sm:$0xff]
    %v62 = vld [vmem:[#allocation2 + $0x78] sm:$0xff]
    %v63 = vld [vmem:[#allocation2 + $0x80] sm:$0xff]
    %v64 = vld [vmem:[#allocation2 + $0x88] sm:$0xff]
    %v65 = vld [vmem:[#allocation2 + $0x90] sm:$0xff]
    %v66 = vld [vmem:[#allocation2 + $0x98] sm:$0xff]
    %v67 = vld [vmem:[#allocation2 + $0xa0] sm:$0xff]
    %v68 = vld [vmem:[#allocation2 + $0xa8] sm:$0xff]
    %v69 = vld [vmem:[#allocation2 + $0xb0] sm:$0xff]
    %v70 = vld [vmem:[#allocation2 + $0xb8] sm:$0xff]
    %v71 = vld [vmem:[#allocation2 + $0xc0] sm:$0xff]
    %v72 = vld [vmem:[#allocation2 + $0xc8] sm:$0xff]
    %v73 = vld [vmem:[#allocation2 + $0xd0] sm:$0xff]
    %v74 = vld [vmem:[#allocation2 + $0xd8] sm:$0xff]
    %v75 = vld [vmem:[#allocation2 + $0xe0] sm:$0xff]
    %v76 = vld [vmem:[#allocation2 + $0xe8] sm:$0xff]
    %v77 = vld [vmem:[#allocation2 + $0xf0] sm:$0xff]
    %v78 = vld [vmem:[#allocation2 + $0xf8] sm:$0xff]
    %v79 = vld [vmem:[%s4] sm:$0x3]
    %v80 = vld [vmem:[%s5] sm:$0xf]
    %v81 = vld [vmem:[%s5 + $0x4] sm:$0xf]
    %v82 = vld [vmem:[%s5 + $0x8] sm:$0xf]
    %v83 = vld [vmem:[%s5 + $0xc] sm:$0xf]
    %v84 = vld [vmem:[%s5 + $0x10] sm:$0xf]
    %v85 = vld [vmem:[%s5 + $0x14] sm:$0xf]
    %v86 = vld [vmem:[%s5 + $0x18] sm:$0xf]
    %v87 = vld [vmem:[%s5 + $0x1c] sm:$0xf]
    %v88 = vld [vmem:[%s5 + $0x20] sm:$0xf]
    %v89 = vld [vmem:[%s5 + $0x24] sm:$0xf]
    %v90 = vld [vmem:[%s5 + $0x28] sm:$0xf]
    %v91 = vld [vmem:[%s5 + $0x2c] sm:$0xf]
    %v92 = vld [vmem:[%s5 + $0x30] sm:$0xf]
    %v93 = vld [vmem:[%s5 + $0x34] sm:$0xf]
    %v94 = vld [vmem:[%s5 + $0x38] sm:$0xf]
    %v95 = vld [vmem:[%s5 + $0x3c] sm:$0xf]
    %v96 = vld [vmem:[%s5 + $0x40] sm:$0xf]
    %v97 = vld [vmem:[%s5 + $0x44] sm:$0xf]
    %v98 = vld [vmem:[%s5 + $0x48] sm:$0xf]
    %v99 = vld [vmem:[%s5 + $0x4c] sm:$0xf]
    %v100 = vld [vmem:[%s5 + $0x50] sm:$0xf]
    %v101 = vld [vmem:[%s5 + $0x54] sm:$0xf]
    %v102 = vld [vmem:[%s5 + $0x58] sm:$0xf]
    %v103 = vld [vmem:[%s5 + $0x5c] sm:$0xf]
    %v104 = vld [vmem:[%s5 + $0x60] sm:$0xf]
    %v105 = vld [vmem:[%s5 + $0x64] sm:$0xf]
    %v106 = vld [vmem:[%s5 + $0x68] sm:$0xf]
    %v107 = vld [vmem:[%s5 + $0x6c] sm:$0xf]
    %v108 = vld [vmem:[%s5 + $0x70] sm:$0xf]
    %v109 = vld [vmem:[%s5 + $0x74] sm:$0xf]
    %v110 = vld [vmem:[%s5 + $0x78] sm:$0xf]
    %v111 = vld [vmem:[%s5 + $0x7c] sm:$0xf]
    %v112 = vld [vmem:[%s6] sm:$0x1]
    %v113 = vld [vmem:[%s0] sm:$0xff]
    %v114 = vld [vmem:[%s0 + $0x8] sm:$0xff]
    %v115 = vld [vmem:[%s0 + $0x10] sm:$0xff]
    %v116 = vld [vmem:[%s0 + $0x18] sm:$0xff]
    %v117 = vld [vmem:[%s0 + $0x20] sm:$0xff]
    %v118 = vld [vmem:[%s0 + $0x28] sm:$0xff]
    %v119 = vld [vmem:[%s0 + $0x30] sm:$0xff]
    %v120 = vld [vmem:[%s0 + $0x38] sm:$0xff]
    %v121 = vld [vmem:[%s0 + $0x40] sm:$0xff]
    %v122 = vld [vmem:[%s0 + $0x48] sm:$0xff]
    %v123 = vld [vmem:[%s0 + $0x50] sm:$0xff]
    %v124 = vld [vmem:[%s0 + $0x58] sm:$0xff]
    %v125 = vld [vmem:[%s0 + $0x60] sm:$0xff]
    %v126 = vld [vmem:[%s0 + $0x68] sm:$0xff]
    %v127 = vld [vmem:[%s0 + $0x70] sm:$0xff]
    %v128 = vld [vmem:[%s0 + $0x78] sm:$0xff]
    %v129 = vpack.c.bf16 %v114, %v113
    %v130 = vpack.c.bf16 %v116, %v115
    %v131 = vpack.c.bf16 %v118, %v117
    %v132 = vpack.c.bf16 %v120, %v119
    %v133 = vpack.c.bf16 %v122, %v121
    %v134 = vpack.c.bf16 %v124, %v123
    %v135 = vpack.c.bf16 %v126, %v125
    %v136 = vpack.c.bf16 %v128, %v127
    %v138 = vperm.slane %v46, 0
    %v139 = vperm.slane %v46, 1
    %v144 = vunpack.c.l.b16 %v44
    %v145 = vunpack.c.h.b16 %v44
    %v146 = vunpack.c.l.b16 %v45
    %v147 = vunpack.c.h.b16 %v45
    %v148 = vpack.c.b16 %v146, %v144
    %v149 = vpack.c.b16 %v147, %v145
    %vm152 = vcmask 130048
    %v154 = vsel %vm152, %v129, 0
    %v157 = vsel %vm152, %v130, 0
    %v160 = vsel %vm152, %v131, 0
    %v163 = vsel %vm152, %v132, 0
    %v166 = vsel %vm152, %v133, 0
    %v169 = vsel %vm152, %v134, 0
    %v172 = vsel %vm152, %v135, 0
    %v175 = vsel %vm152, %v136, 0
    %177 = vmatpush.bf16.msra.mxu0 0
    %178 = vmatpush.bf16.msra.mxu0 0
    %179 = vmatpush.bf16.msra.mxu0 0
    %180 = vmatpush.bf16.msra.mxu0 0
    %181 = vmatpush.bf16.msra.mxu0 0
    %182 = vmatpush.bf16.msra.mxu0 0
    %183 = vmatpush.bf16.msra.mxu0 0
    %184 = vmatpush.bf16.msra.mxu0 %v148
    %185 = vmatmul.bf16.gmra.mxu0 %v154
    %v186 = vpop.f32.mrf.mxu0
    %v187 = vadd.f32 %v138, %v186
    %v188 = vpop.f32.mrf.mxu0
    %v189 = vadd.f32 %v138, %v188
    %190 = vmatmul.bf16.gmra.mxu0 %v157
    %v191 = vpop.f32.mrf.mxu0
    %v192 = vadd.f32 %v138, %v191
    %v193 = vpop.f32.mrf.mxu0
    %v194 = vadd.f32 %v138, %v193
    %195 = vmatmul.bf16.gmra.mxu0 %v160
    %v196 = vpop.f32.mrf.mxu0
    %v197 = vadd.f32 %v138, %v196
    %v198 = vpop.f32.mrf.mxu0
    %v199 = vadd.f32 %v138, %v198
    %200 = vmatmul.bf16.gmra.mxu0 %v163
    %v201 = vpop.f32.mrf.mxu0
    %v202 = vadd.f32 %v138, %v201
    %v203 = vpop.f32.mrf.mxu0
    %v204 = vadd.f32 %v138, %v203
    %205 = vmatmul.bf16.gmra.mxu0 %v166
    %v206 = vpop.f32.mrf.mxu0
    %v207 = vadd.f32 %v138, %v206
    %v208 = vpop.f32.mrf.mxu0
    %v209 = vadd.f32 %v138, %v208
    %210 = vmatmul.bf16.gmra.mxu0 %v169
    %v211 = vpop.f32.mrf.mxu0
    %v212 = vadd.f32 %v138, %v211
    %v213 = vpop.f32.mrf.mxu0
    %v214 = vadd.f32 %v138, %v213
    %215 = vmatmul.bf16.gmra.mxu0 %v172
    %v216 = vpop.f32.mrf.mxu0
    %v217 = vadd.f32 %v138, %v216
    %v218 = vpop.f32.mrf.mxu0
    %v219 = vadd.f32 %v138, %v218
    %220 = vmatmul.bf16.gmra.mxu0 %v175
    %v221 = vpop.f32.mrf.mxu0
    %v222 = vadd.f32 %v138, %v221
    %v223 = vpop.f32.mrf.mxu0
    %v224 = vadd.f32 %v138, %v223
    %225 = vdwg.mxu0
    %226 = vmatpush.bf16.msra.mxu0 0
    %227 = vmatpush.bf16.msra.mxu0 0
    %228 = vmatpush.bf16.msra.mxu0 0
    %229 = vmatpush.bf16.msra.mxu0 0
    %230 = vmatpush.bf16.msra.mxu0 0
    %231 = vmatpush.bf16.msra.mxu0 0
    %232 = vmatpush.bf16.msra.mxu0 0
    %233 = vmatpush.bf16.msra.mxu0 %v149
    %234 = vmatmul.bf16.gmra.mxu0 %v154
    %v235 = vpop.f32.mrf.mxu0
    %v236 = vadd.f32 %v139, %v235
    %v237 = vpop.f32.mrf.mxu0
    %v238 = vadd.f32 %v139, %v237
    %239 = vmatmul.bf16.gmra.mxu0 %v157
    %v240 = vpop.f32.mrf.mxu0
    %v241 = vadd.f32 %v139, %v240
    %v242 = vpop.f32.mrf.mxu0
    %v243 = vadd.f32 %v139, %v242
    %244 = vmatmul.bf16.gmra.mxu0 %v160
    %v245 = vpop.f32.mrf.mxu0
    %v246 = vadd.f32 %v139, %v245
    %v247 = vpop.f32.mrf.mxu0
    %v248 = vadd.f32 %v139, %v247
    %249 = vmatmul.bf16.gmra.mxu0 %v163
    %v250 = vpop.f32.mrf.mxu0
    %v251 = vadd.f32 %v139, %v250
    %v252 = vpop.f32.mrf.mxu0
    %v253 = vadd.f32 %v139, %v252
    %254 = vmatmul.bf16.gmra.mxu0 %v166
    %v255 = vpop.f32.mrf.mxu0
    %v256 = vadd.f32 %v139, %v255
    %v257 = vpop.f32.mrf.mxu0
    %v258 = vadd.f32 %v139, %v257
    %259 = vmatmul.bf16.gmra.mxu0 %v169
    %v260 = vpop.f32.mrf.mxu0
    %v261 = vadd.f32 %v139, %v260
    %v262 = vpop.f32.mrf.mxu0
    %v263 = vadd.f32 %v139, %v262
    %264 = vmatmul.bf16.gmra.mxu0 %v172
    %v265 = vpop.f32.mrf.mxu0
    %v266 = vadd.f32 %v139, %v265
    %v267 = vpop.f32.mrf.mxu0
    %v268 = vadd.f32 %v139, %v267
    %269 = vmatmul.bf16.gmra.mxu0 %v175
    %v270 = vpop.f32.mrf.mxu0
    %v271 = vadd.f32 %v139, %v270
    %v272 = vpop.f32.mrf.mxu0
    %v273 = vadd.f32 %v139, %v272
    %274 = vdwg.mxu0
    %v275 = vmax.f32 %v187, 0.0
    %v276 = vmax.f32 %v236, 0.0
    %v277 = vmax.f32 %v189, 0.0
    %v278 = vmax.f32 %v238, 0.0
    %v279 = vmax.f32 %v192, 0.0
    %v280 = vmax.f32 %v241, 0.0
    %v281 = vmax.f32 %v194, 0.0
    %v282 = vmax.f32 %v243, 0.0
    %v283 = vmax.f32 %v197, 0.0
    %v284 = vmax.f32 %v246, 0.0
    %v285 = vmax.f32 %v199, 0.0
    %v286 = vmax.f32 %v248, 0.0
    %v287 = vmax.f32 %v202, 0.0
    %v288 = vmax.f32 %v251, 0.0
    %v289 = vmax.f32 %v204, 0.0
    %v290 = vmax.f32 %v253, 0.0
    %v291 = vmax.f32 %v207, 0.0
    %v292 = vmax.f32 %v256, 0.0
    %v293 = vmax.f32 %v209, 0.0
    %v294 = vmax.f32 %v258, 0.0
    %v295 = vmax.f32 %v212, 0.0
    %v296 = vmax.f32 %v261, 0.0
    %v297 = vmax.f32 %v214, 0.0
    %v298 = vmax.f32 %v263, 0.0
    %v299 = vmax.f32 %v217, 0.0
    %v300 = vmax.f32 %v266, 0.0
    %v301 = vmax.f32 %v219, 0.0
    %v302 = vmax.f32 %v268, 0.0
    %v303 = vmax.f32 %v222, 0.0
    %v304 = vmax.f32 %v271, 0.0
    %v305 = vmax.f32 %v224, 0.0
    %v306 = vmax.f32 %v273, 0.0
    %v307 = vpack.c.bf16 %v277, %v275
    %v308 = vpack.c.bf16 %v278, %v276
    %v309 = vpack.c.bf16 %v281, %v279
    %v310 = vpack.c.bf16 %v282, %v280
    %v311 = vpack.c.bf16 %v285, %v283
    %v312 = vpack.c.bf16 %v286, %v284
    %v313 = vpack.c.bf16 %v289, %v287
    %v314 = vpack.c.bf16 %v290, %v288
    %v315 = vpack.c.bf16 %v293, %v291
    %v316 = vpack.c.bf16 %v294, %v292
    %v317 = vpack.c.bf16 %v297, %v295
    %v318 = vpack.c.bf16 %v298, %v296
    %v319 = vpack.c.bf16 %v301, %v299
    %v320 = vpack.c.bf16 %v302, %v300
    %v321 = vpack.c.bf16 %v305, %v303
    %v322 = vpack.c.bf16 %v306, %v304
    %v324 = vperm.slane %v79, 0
    %v325 = vperm.slane %v79, 1
    %v360 = vunpack.c.l.b16 %v47
    %v361 = vunpack.c.h.b16 %v47
    %v362 = vunpack.c.l.b16 %v48
    %v363 = vunpack.c.h.b16 %v48
    %v364 = vunpack.c.l.b16 %v49
    %v365 = vunpack.c.h.b16 %v49
    %v366 = vunpack.c.l.b16 %v50
    %v367 = vunpack.c.h.b16 %v50
    %v368 = vunpack.c.l.b16 %v51
    %v369 = vunpack.c.h.b16 %v51
    %v370 = vunpack.c.l.b16 %v52
    %v371 = vunpack.c.h.b16 %v52
    %v372 = vunpack.c.l.b16 %v53
    %v373 = vunpack.c.h.b16 %v53
    %v374 = vunpack.c.l.b16 %v54
    %v375 = vunpack.c.h.b16 %v54
    %v376 = vunpack.c.l.b16 %v55
    %v377 = vunpack.c.h.b16 %v55
    %v378 = vunpack.c.l.b16 %v56
    %v379 = vunpack.c.h.b16 %v56
    %v380 = vunpack.c.l.b16 %v57
    %v381 = vunpack.c.h.b16 %v57
    %v382 = vunpack.c.l.b16 %v58
    %v383 = vunpack.c.h.b16 %v58
    %v384 = vunpack.c.l.b16 %v59
    %v385 = vunpack.c.h.b16 %v59
    %v386 = vunpack.c.l.b16 %v60
    %v387 = vunpack.c.h.b16 %v60
    %v388 = vunpack.c.l.b16 %v61
    %v389 = vunpack.c.h.b16 %v61
    %v390 = vunpack.c.l.b16 %v62
    %v391 = vunpack.c.h.b16 %v62
    %v392 = vunpack.c.l.b16 %v63
    %v393 = vunpack.c.h.b16 %v63
    %v394 = vunpack.c.l.b16 %v64
    %v395 = vunpack.c.h.b16 %v64
    %v396 = vunpack.c.l.b16 %v65
    %v397 = vunpack.c.h.b16 %v65
    %v398 = vunpack.c.l.b16 %v66
    %v399 = vunpack.c.h.b16 %v66
    %v400 = vunpack.c.l.b16 %v67
    %v401 = vunpack.c.h.b16 %v67
    %v402 = vunpack.c.l.b16 %v68
    %v403 = vunpack.c.h.b16 %v68
    %v404 = vunpack.c.l.b16 %v69
    %v405 = vunpack.c.h.b16 %v69
    %v406 = vunpack.c.l.b16 %v70
    %v407 = vunpack.c.h.b16 %v70
    %v408 = vunpack.c.l.b16 %v71
    %v409 = vunpack.c.h.b16 %v71
    %v410 = vunpack.c.l.b16 %v72
    %v411 = vunpack.c.h.b16 %v72
    %v412 = vunpack.c.l.b16 %v73
    %v413 = vunpack.c.h.b16 %v73
    %v414 = vunpack.c.l.b16 %v74
    %v415 = vunpack.c.h.b16 %v74
    %v416 = vunpack.c.l.b16 %v75
    %v417 = vunpack.c.h.b16 %v75
    %v418 = vunpack.c.l.b16 %v76
    %v419 = vunpack.c.h.b16 %v76
    %v420 = vunpack.c.l.b16 %v77
    %v421 = vunpack.c.h.b16 %v77
    %v422 = vunpack.c.l.b16 %v78
    %v423 = vunpack.c.h.b16 %v78
    %v424 = vpack.c.b16 %v362, %v360
    %v425 = vpack.c.b16 %v363, %v361
    %v426 = vpack.c.b16 %v366, %v364
    %v427 = vpack.c.b16 %v367, %v365
    %v428 = vpack.c.b16 %v370, %v368
    %v429 = vpack.c.b16 %v371, %v369
    %v430 = vpack.c.b16 %v374, %v372
    %v431 = vpack.c.b16 %v375, %v373
    %v432 = vpack.c.b16 %v378, %v376
    %v433 = vpack.c.b16 %v379, %v377
    %v434 = vpack.c.b16 %v382, %v380
    %v435 = vpack.c.b16 %v383, %v381
    %v436 = vpack.c.b16 %v386, %v384
    %v437 = vpack.c.b16 %v387, %v385
    %v438 = vpack.c.b16 %v390, %v388
    %v439 = vpack.c.b16 %v391, %v389
    %v440 = vpack.c.b16 %v394, %v392
    %v441 = vpack.c.b16 %v395, %v393
    %v442 = vpack.c.b16 %v398, %v396
    %v443 = vpack.c.b16 %v399, %v397
    %v444 = vpack.c.b16 %v402, %v400
    %v445 = vpack.c.b16 %v403, %v401
    %v446 = vpack.c.b16 %v406, %v404
    %v447 = vpack.c.b16 %v407, %v405
    %v448 = vpack.c.b16 %v410, %v408
    %v449 = vpack.c.b16 %v411, %v409
    %v450 = vpack.c.b16 %v414, %v412
    %v451 = vpack.c.b16 %v415, %v413
    %v452 = vpack.c.b16 %v418, %v416
    %v453 = vpack.c.b16 %v419, %v417
    %v454 = vpack.c.b16 %v422, %v420
    %v455 = vpack.c.b16 %v423, %v421
    %488 = vmatpush.bf16.msra.mxu0 %v438
    %489 = vmatpush.bf16.msra.mxu0 %v436
    %490 = vmatpush.bf16.msra.mxu0 %v434
    %491 = vmatpush.bf16.msra.mxu0 %v432
    %492 = vmatpush.bf16.msra.mxu0 %v430
    %493 = vmatpush.bf16.msra.mxu0 %v428
    %494 = vmatpush.bf16.msra.mxu0 %v426
    %495 = vmatpush.bf16.msra.mxu0 %v424
    %496 = vmatmul.bf16.gmra.mxu0 %v307
    %v497 = vpop.f32.mrf.mxu0
    %v498 = vadd.f32 %v324, %v497
    %v499 = vpop.f32.mrf.mxu0
    %v500 = vadd.f32 %v324, %v499
    %501 = vmatmul.bf16.gmra.mxu0 %v309
    %v502 = vpop.f32.mrf.mxu0
    %v503 = vadd.f32 %v324, %v502
    %v504 = vpop.f32.mrf.mxu0
    %v505 = vadd.f32 %v324, %v504
    %506 = vmatmul.bf16.gmra.mxu0 %v311
    %v507 = vpop.f32.mrf.mxu0
    %v508 = vadd.f32 %v324, %v507
    %v509 = vpop.f32.mrf.mxu0
    %v510 = vadd.f32 %v324, %v509
    %511 = vmatmul.bf16.gmra.mxu0 %v313
    %v512 = vpop.f32.mrf.mxu0
    %v513 = vadd.f32 %v324, %v512
    %v514 = vpop.f32.mrf.mxu0
    %v515 = vadd.f32 %v324, %v514
    %516 = vmatmul.bf16.gmra.mxu0 %v315
    %v517 = vpop.f32.mrf.mxu0
    %v518 = vadd.f32 %v324, %v517
    %v519 = vpop.f32.mrf.mxu0
    %v520 = vadd.f32 %v324, %v519
    %521 = vmatmul.bf16.gmra.mxu0 %v317
    %v522 = vpop.f32.mrf.mxu0
    %v523 = vadd.f32 %v324, %v522
    %v524 = vpop.f32.mrf.mxu0
    %v525 = vadd.f32 %v324, %v524
    %526 = vmatmul.bf16.gmra.mxu0 %v319
    %v527 = vpop.f32.mrf.mxu0
    %v528 = vadd.f32 %v324, %v527
    %v529 = vpop.f32.mrf.mxu0
    %v530 = vadd.f32 %v324, %v529
    %531 = vmatmul.bf16.gmra.mxu0 %v321
    %v532 = vpop.f32.mrf.mxu0
    %v533 = vadd.f32 %v324, %v532
    %v534 = vpop.f32.mrf.mxu0
    %v535 = vadd.f32 %v324, %v534
    %536 = vdwg.mxu0
    %537 = vmatpush.bf16.msra.mxu0 %v454
    %538 = vmatpush.bf16.msra.mxu0 %v452
    %539 = vmatpush.bf16.msra.mxu0 %v450
    %540 = vmatpush.bf16.msra.mxu0 %v448
    %541 = vmatpush.bf16.msra.mxu0 %v446
    %542 = vmatpush.bf16.msra.mxu0 %v444
    %543 = vmatpush.bf16.msra.mxu0 %v442
    %544 = vmatpush.bf16.msra.mxu0 %v440
    %545 = vmatmul.bf16.gmra.mxu0 %v308
    %v546 = vpop.f32.mrf.mxu0
    %v547 = vadd.f32 %v498, %v546
    %v548 = vpop.f32.mrf.mxu0
    %v549 = vadd.f32 %v500, %v548
    %550 = vmatmul.bf16.gmra.mxu0 %v310
    %v551 = vpop.f32.mrf.mxu0
    %v552 = vadd.f32 %v503, %v551
    %v553 = vpop.f32.mrf.mxu0
    %v554 = vadd.f32 %v505, %v553
    %555 = vmatmul.bf16.gmra.mxu0 %v312
    %v556 = vpop.f32.mrf.mxu0
    %v557 = vadd.f32 %v508, %v556
    %v558 = vpop.f32.mrf.mxu0
    %v559 = vadd.f32 %v510, %v558
    %560 = vmatmul.bf16.gmra.mxu0 %v314
    %v561 = vpop.f32.mrf.mxu0
    %v562 = vadd.f32 %v513, %v561
    %v563 = vpop.f32.mrf.mxu0
    %v564 = vadd.f32 %v515, %v563
    %565 = vmatmul.bf16.gmra.mxu0 %v316
    %v566 = vpop.f32.mrf.mxu0
    %v567 = vadd.f32 %v518, %v566
    %v568 = vpop.f32.mrf.mxu0
    %v569 = vadd.f32 %v520, %v568
    %570 = vmatmul.bf16.gmra.mxu0 %v318
    %v571 = vpop.f32.mrf.mxu0
    %v572 = vadd.f32 %v523, %v571
    %v573 = vpop.f32.mrf.mxu0
    %v574 = vadd.f32 %v525, %v573
    %575 = vmatmul.bf16.gmra.mxu0 %v320
    %v576 = vpop.f32.mrf.mxu0
    %v577 = vadd.f32 %v528, %v576
    %v578 = vpop.f32.mrf.mxu0
    %v579 = vadd.f32 %v530, %v578
    %580 = vmatmul.bf16.gmra.mxu0 %v322
    %v581 = vpop.f32.mrf.mxu0
    %v582 = vadd.f32 %v533, %v581
    %v583 = vpop.f32.mrf.mxu0
    %v584 = vadd.f32 %v535, %v583
    %585 = vdwg.mxu0
    %586 = vmatpush.bf16.msra.mxu0 %v439
    %587 = vmatpush.bf16.msra.mxu0 %v437
    %588 = vmatpush.bf16.msra.mxu0 %v435
    %589 = vmatpush.bf16.msra.mxu0 %v433
    %590 = vmatpush.bf16.msra.mxu0 %v431
    %591 = vmatpush.bf16.msra.mxu0 %v429
    %592 = vmatpush.bf16.msra.mxu0 %v427
    %593 = vmatpush.bf16.msra.mxu0 %v425
    %594 = vmatmul.bf16.gmra.mxu0 %v307
    %v595 = vpop.f32.mrf.mxu0
    %v596 = vadd.f32 %v325, %v595
    %v597 = vpop.f32.mrf.mxu0
    %v598 = vadd.f32 %v325, %v597
    %599 = vmatmul.bf16.gmra.mxu0 %v309
    %v600 = vpop.f32.mrf.mxu0
    %v601 = vadd.f32 %v325, %v600
    %v602 = vpop.f32.mrf.mxu0
    %v603 = vadd.f32 %v325, %v602
    %604 = vmatmul.bf16.gmra.mxu0 %v311
    %v605 = vpop.f32.mrf.mxu0
    %v606 = vadd.f32 %v325, %v605
    %v607 = vpop.f32.mrf.mxu0
    %v608 = vadd.f32 %v325, %v607
    %609 = vmatmul.bf16.gmra.mxu0 %v313
    %v610 = vpop.f32.mrf.mxu0
    %v611 = vadd.f32 %v325, %v610
    %v612 = vpop.f32.mrf.mxu0
    %v613 = vadd.f32 %v325, %v612
    %614 = vmatmul.bf16.gmra.mxu0 %v315
    %v615 = vpop.f32.mrf.mxu0
    %v616 = vadd.f32 %v325, %v615
    %v617 = vpop.f32.mrf.mxu0
    %v618 = vadd.f32 %v325, %v617
    %619 = vmatmul.bf16.gmra.mxu0 %v317
    %v620 = vpop.f32.mrf.mxu0
    %v621 = vadd.f32 %v325, %v620
    %v622 = vpop.f32.mrf.mxu0
    %v623 = vadd.f32 %v325, %v622
    %624 = vmatmul.bf16.gmra.mxu0 %v319
    %v625 = vpop.f32.mrf.mxu0
    %v626 = vadd.f32 %v325, %v625
    %v627 = vpop.f32.mrf.mxu0
    %v628 = vadd.f32 %v325, %v627
    %629 = vmatmul.bf16.gmra.mxu0 %v321
    %v630 = vpop.f32.mrf.mxu0
    %v631 = vadd.f32 %v325, %v630
    %v632 = vpop.f32.mrf.mxu0
    %v633 = vadd.f32 %v325, %v632
    %634 = vdwg.mxu0
    %635 = vmatpush.bf16.msra.mxu0 %v455
    %636 = vmatpush.bf16.msra.mxu0 %v453
    %637 = vmatpush.bf16.msra.mxu0 %v451
    %638 = vmatpush.bf16.msra.mxu0 %v449
    %639 = vmatpush.bf16.msra.mxu0 %v447
    %640 = vmatpush.bf16.msra.mxu0 %v445
    %641 = vmatpush.bf16.msra.mxu0 %v443
    %642 = vmatpush.bf16.msra.mxu0 %v441
    %643 = vmatmul.bf16.gmra.mxu0 %v308
    %v644 = vpop.f32.mrf.mxu0
    %v645 = vadd.f32 %v596, %v644
    %v646 = vpop.f32.mrf.mxu0
    %v647 = vadd.f32 %v598, %v646
    %648 = vmatmul.bf16.gmra.mxu0 %v310
    %v649 = vpop.f32.mrf.mxu0
    %v650 = vadd.f32 %v601, %v649
    %v651 = vpop.f32.mrf.mxu0
    %v652 = vadd.f32 %v603, %v651
    %653 = vmatmul.bf16.gmra.mxu0 %v312
    %v654 = vpop.f32.mrf.mxu0
    %v655 = vadd.f32 %v606, %v654
    %v656 = vpop.f32.mrf.mxu0
    %v657 = vadd.f32 %v608, %v656
    %658 = vmatmul.bf16.gmra.mxu0 %v314
    %v659 = vpop.f32.mrf.mxu0
    %v660 = vadd.f32 %v611, %v659
    %v661 = vpop.f32.mrf.mxu0
    %v662 = vadd.f32 %v613, %v661
    %663 = vmatmul.bf16.gmra.mxu0 %v316
    %v664 = vpop.f32.mrf.mxu0
    %v665 = vadd.f32 %v616, %v664
    %v666 = vpop.f32.mrf.mxu0
    %v667 = vadd.f32 %v618, %v666
    %668 = vmatmul.bf16.gmra.mxu0 %v318
    %v669 = vpop.f32.mrf.mxu0
    %v670 = vadd.f32 %v621, %v669
    %v671 = vpop.f32.mrf.mxu0
    %v672 = vadd.f32 %v623, %v671
    %673 = vmatmul.bf16.gmra.mxu0 %v320
    %v674 = vpop.f32.mrf.mxu0
    %v675 = vadd.f32 %v626, %v674
    %v676 = vpop.f32.mrf.mxu0
    %v677 = vadd.f32 %v628, %v676
    %678 = vmatmul.bf16.gmra.mxu0 %v322
    %v679 = vpop.f32.mrf.mxu0
    %v680 = vadd.f32 %v631, %v679
    %v681 = vpop.f32.mrf.mxu0
    %v682 = vadd.f32 %v633, %v681
    %683 = vdwg.mxu0
    %v684 = vmax.f32 %v547, 0.0
    %v685 = vmax.f32 %v645, 0.0
    %v686 = vmax.f32 %v549, 0.0
    %v687 = vmax.f32 %v647, 0.0
    %v688 = vmax.f32 %v552, 0.0
    %v689 = vmax.f32 %v650, 0.0
    %v690 = vmax.f32 %v554, 0.0
    %v691 = vmax.f32 %v652, 0.0
    %v692 = vmax.f32 %v557, 0.0
    %v693 = vmax.f32 %v655, 0.0
    %v694 = vmax.f32 %v559, 0.0
    %v695 = vmax.f32 %v657, 0.0
    %v696 = vmax.f32 %v562, 0.0
    %v697 = vmax.f32 %v660, 0.0
    %v698 = vmax.f32 %v564, 0.0
    %v699 = vmax.f32 %v662, 0.0
    %v700 = vmax.f32 %v567, 0.0
    %v701 = vmax.f32 %v665, 0.0
    %v702 = vmax.f32 %v569, 0.0
    %v703 = vmax.f32 %v667, 0.0
    %v704 = vmax.f32 %v572, 0.0
    %v705 = vmax.f32 %v670, 0.0
    %v706 = vmax.f32 %v574, 0.0
    %v707 = vmax.f32 %v672, 0.0
    %v708 = vmax.f32 %v577, 0.0
    %v709 = vmax.f32 %v675, 0.0
    %v710 = vmax.f32 %v579, 0.0
    %v711 = vmax.f32 %v677, 0.0
    %v712 = vmax.f32 %v582, 0.0
    %v713 = vmax.f32 %v680, 0.0
    %v714 = vmax.f32 %v584, 0.0
    %v715 = vmax.f32 %v682, 0.0
    %v716 = vpack.c.bf16 %v686, %v684
    %v717 = vpack.c.bf16 %v687, %v685
    %v718 = vpack.c.bf16 %v690, %v688
    %v719 = vpack.c.bf16 %v691, %v689
    %v720 = vpack.c.bf16 %v694, %v692
    %v721 = vpack.c.bf16 %v695, %v693
    %v722 = vpack.c.bf16 %v698, %v696
    %v723 = vpack.c.bf16 %v699, %v697
    %v724 = vpack.c.bf16 %v702, %v700
    %v725 = vpack.c.bf16 %v703, %v701
    %v726 = vpack.c.bf16 %v706, %v704
    %v727 = vpack.c.bf16 %v707, %v705
    %v728 = vpack.c.bf16 %v710, %v708
    %v729 = vpack.c.bf16 %v711, %v709
    %v730 = vpack.c.bf16 %v714, %v712
    %v731 = vpack.c.bf16 %v715, %v713
    %v733 = vperm.slane %v112, 0
    %v767 = vunpack.c.l.b16 %v80
    %v768 = vunpack.c.l.b16 %v81
    %v769 = vunpack.c.l.b16 %v82
    %v770 = vunpack.c.l.b16 %v83
    %v771 = vunpack.c.l.b16 %v84
    %v772 = vunpack.c.l.b16 %v85
    %v773 = vunpack.c.l.b16 %v86
    %v774 = vunpack.c.l.b16 %v87
    %v775 = vunpack.c.l.b16 %v88
    %v776 = vunpack.c.l.b16 %v89
    %v777 = vunpack.c.l.b16 %v90
    %v778 = vunpack.c.l.b16 %v91
    %v779 = vunpack.c.l.b16 %v92
    %v780 = vunpack.c.l.b16 %v93
    %v781 = vunpack.c.l.b16 %v94
    %v782 = vunpack.c.l.b16 %v95
    %v783 = vunpack.c.l.b16 %v96
    %v784 = vunpack.c.l.b16 %v97
    %v785 = vunpack.c.l.b16 %v98
    %v786 = vunpack.c.l.b16 %v99
    %v787 = vunpack.c.l.b16 %v100
    %v788 = vunpack.c.l.b16 %v101
    %v789 = vunpack.c.l.b16 %v102
    %v790 = vunpack.c.l.b16 %v103
    %v791 = vunpack.c.l.b16 %v104
    %v792 = vunpack.c.l.b16 %v105
    %v793 = vunpack.c.l.b16 %v106
    %v794 = vunpack.c.l.b16 %v107
    %v795 = vunpack.c.l.b16 %v108
    %v796 = vunpack.c.l.b16 %v109
    %v797 = vunpack.c.l.b16 %v110
    %v798 = vunpack.c.l.b16 %v111
    %v799 = vpack.c.b16 %v768, %v767
    %v800 = vpack.c.b16 %v770, %v769
    %v801 = vpack.c.b16 %v772, %v771
    %v802 = vpack.c.b16 %v774, %v773
    %v803 = vpack.c.b16 %v776, %v775
    %v804 = vpack.c.b16 %v778, %v777
    %v805 = vpack.c.b16 %v780, %v779
    %v806 = vpack.c.b16 %v782, %v781
    %v807 = vpack.c.b16 %v784, %v783
    %v808 = vpack.c.b16 %v786, %v785
    %v809 = vpack.c.b16 %v788, %v787
    %v810 = vpack.c.b16 %v790, %v789
    %v811 = vpack.c.b16 %v792, %v791
    %v812 = vpack.c.b16 %v794, %v793
    %v813 = vpack.c.b16 %v796, %v795
    %v814 = vpack.c.b16 %v798, %v797
    %831 = vmatpush.bf16.msra.mxu0 %v806
    %832 = vmatpush.bf16.msra.mxu0 %v805
    %833 = vmatpush.bf16.msra.mxu0 %v804
    %834 = vmatpush.bf16.msra.mxu0 %v803
    %835 = vmatpush.bf16.msra.mxu0 %v802
    %836 = vmatpush.bf16.msra.mxu0 %v801
    %837 = vmatpush.bf16.msra.mxu0 %v800
    %838 = vmatpush.bf16.msra.mxu0 %v799
    %839 = vmatmul.bf16.gmra.mxu0 %v716
    %v840 = vpop.f32.mrf.mxu0
    %v841 = vadd.f32 %v733, %v840
    %v842 = vpop.f32.mrf.mxu0
    %v843 = vadd.f32 %v733, %v842
    %844 = vmatmul.bf16.gmra.mxu0 %v718
    %v845 = vpop.f32.mrf.mxu0
    %v846 = vadd.f32 %v733, %v845
    %v847 = vpop.f32.mrf.mxu0
    %v848 = vadd.f32 %v733, %v847
    %849 = vmatmul.bf16.gmra.mxu0 %v720
    %v850 = vpop.f32.mrf.mxu0
    %v851 = vadd.f32 %v733, %v850
    %v852 = vpop.f32.mrf.mxu0
    %v853 = vadd.f32 %v733, %v852
    %854 = vmatmul.bf16.gmra.mxu0 %v722
    %v855 = vpop.f32.mrf.mxu0
    %v856 = vadd.f32 %v733, %v855
    %v857 = vpop.f32.mrf.mxu0
    %v858 = vadd.f32 %v733, %v857
    %859 = vmatmul.bf16.gmra.mxu0 %v724
    %v860 = vpop.f32.mrf.mxu0
    %v861 = vadd.f32 %v733, %v860
    %v862 = vpop.f32.mrf.mxu0
    %v863 = vadd.f32 %v733, %v862
    %864 = vmatmul.bf16.gmra.mxu0 %v726
    %v865 = vpop.f32.mrf.mxu0
    %v866 = vadd.f32 %v733, %v865
    %v867 = vpop.f32.mrf.mxu0
    %v868 = vadd.f32 %v733, %v867
    %869 = vmatmul.bf16.gmra.mxu0 %v728
    %v870 = vpop.f32.mrf.mxu0
    %v871 = vadd.f32 %v733, %v870
    %v872 = vpop.f32.mrf.mxu0
    %v873 = vadd.f32 %v733, %v872
    %874 = vmatmul.bf16.gmra.mxu0 %v730
    %v875 = vpop.f32.mrf.mxu0
    %v876 = vadd.f32 %v733, %v875
    %v877 = vpop.f32.mrf.mxu0
    %v878 = vadd.f32 %v733, %v877
    %879 = vdwg.mxu0
    %880 = vmatpush.bf16.msra.mxu0 %v814
    %881 = vmatpush.bf16.msra.mxu0 %v813
    %882 = vmatpush.bf16.msra.mxu0 %v812
    %883 = vmatpush.bf16.msra.mxu0 %v811
    %884 = vmatpush.bf16.msra.mxu0 %v810
    %885 = vmatpush.bf16.msra.mxu0 %v809
    %886 = vmatpush.bf16.msra.mxu0 %v808
    %887 = vmatpush.bf16.msra.mxu0 %v807
    %888 = vmatmul.bf16.gmra.mxu0 %v717
    %v889 = vpop.f32.mrf.mxu0
    %v890 = vadd.f32 %v841, %v889
    %v891 = vpop.f32.mrf.mxu0
    %v892 = vadd.f32 %v843, %v891
    %893 = vmatmul.bf16.gmra.mxu0 %v719
    %v894 = vpop.f32.mrf.mxu0
    %v895 = vadd.f32 %v846, %v894
    %v896 = vpop.f32.mrf.mxu0
    %v897 = vadd.f32 %v848, %v896
    %898 = vmatmul.bf16.gmra.mxu0 %v721
    %v899 = vpop.f32.mrf.mxu0
    %v900 = vadd.f32 %v851, %v899
    %v901 = vpop.f32.mrf.mxu0
    %v902 = vadd.f32 %v853, %v901
    %903 = vmatmul.bf16.gmra.mxu0 %v723
    %v904 = vpop.f32.mrf.mxu0
    %v905 = vadd.f32 %v856, %v904
    %v906 = vpop.f32.mrf.mxu0
    %v907 = vadd.f32 %v858, %v906
    %908 = vmatmul.bf16.gmra.mxu0 %v725
    %v909 = vpop.f32.mrf.mxu0
    %v910 = vadd.f32 %v861, %v909
    %v911 = vpop.f32.mrf.mxu0
    %v912 = vadd.f32 %v863, %v911
    %913 = vmatmul.bf16.gmra.mxu0 %v727
    %v914 = vpop.f32.mrf.mxu0
    %v915 = vadd.f32 %v866, %v914
    %v916 = vpop.f32.mrf.mxu0
    %v917 = vadd.f32 %v868, %v916
    %918 = vmatmul.bf16.gmra.mxu0 %v729
    %v919 = vpop.f32.mrf.mxu0
    %v920 = vadd.f32 %v871, %v919
    %v921 = vpop.f32.mrf.mxu0
    %v922 = vadd.f32 %v873, %v921
    %923 = vmatmul.bf16.gmra.mxu0 %v731
    %v924 = vpop.f32.mrf.mxu0
    %v925 = vadd.f32 %v876, %v924
    %v926 = vpop.f32.mrf.mxu0
    %v927 = vadd.f32 %v878, %v926
    %928 = vdwg.mxu0
    %v929 = vtanh.pop %v890
    %v930 = vtanh.pop %v892
    %v931 = vtanh.pop %v895
    %v932 = vtanh.pop %v897
    %v933 = vtanh.pop %v900
    %v934 = vtanh.pop %v902
    %v935 = vtanh.pop %v905
    %v936 = vtanh.pop %v907
    %v937 = vtanh.pop %v910
    %v938 = vtanh.pop %v912
    %v939 = vtanh.pop %v915
    %v940 = vtanh.pop %v917
    %v941 = vtanh.pop %v920
    %v942 = vtanh.pop %v922
    %v943 = vtanh.pop %v925
    %v944 = vtanh.pop %v927
    %v945 = vpack.c.bf16 %v929, %v929
    %v946 = vpack.c.bf16 %v930, %v930
    %v947 = vpack.c.bf16 %v931, %v931
    %v948 = vpack.c.bf16 %v932, %v932
    %v949 = vpack.c.bf16 %v933, %v933
    %v950 = vpack.c.bf16 %v934, %v934
    %v951 = vpack.c.bf16 %v935, %v935
    %v952 = vpack.c.bf16 %v936, %v936
    %v953 = vpack.c.bf16 %v937, %v937
    %v954 = vpack.c.bf16 %v938, %v938
    %v955 = vpack.c.bf16 %v939, %v939
    %v956 = vpack.c.bf16 %v940, %v940
    %v957 = vpack.c.bf16 %v941, %v941
    %v958 = vpack.c.bf16 %v942, %v942
    %v959 = vpack.c.bf16 %v943, %v943
    %v960 = vpack.c.bf16 %v944, %v944
    %961 = vst [vmem:[#allocation5] sm:$0xf] %v945
    %962 = vst [vmem:[#allocation5 + $0x4] sm:$0xf] %v946
    %963 = vst [vmem:[#allocation5 + $0x8] sm:$0xf] %v947
    %964 = vst [vmem:[#allocation5 + $0xc] sm:$0xf] %v948
    %965 = vst [vmem:[#allocation5 + $0x10] sm:$0xf] %v949
    %966 = vst [vmem:[#allocation5 + $0x14] sm:$0xf] %v950
    %967 = vst [vmem:[#allocation5 + $0x18] sm:$0xf] %v951
    %968 = vst [vmem:[#allocation5 + $0x1c] sm:$0xf] %v952
    %969 = vst [vmem:[#allocation5 + $0x20] sm:$0xf] %v953
    %970 = vst [vmem:[#allocation5 + $0x24] sm:$0xf] %v954
    %971 = vst [vmem:[#allocation5 + $0x28] sm:$0xf] %v955
    %972 = vst [vmem:[#allocation5 + $0x2c] sm:$0xf] %v956
    %973 = vst [vmem:[#allocation5 + $0x30] sm:$0xf] %v957
    %974 = vst [vmem:[#allocation5 + $0x34] sm:$0xf] %v958
    %975 = vst [vmem:[#allocation5 + $0x38] sm:$0xf] %v959
    %976 = vst [vmem:[#allocation5 + $0x3c] sm:$0xf] %v960
    // Predicated region
    $region34: #{tpu_custom_call.1} parent=1 // pred_check
      _
    $region35: #{tpu_custom_call.1} parent=1 // pred_check_branch
      %978 = sbr.rel (0) target = $region37
    $region36: #{tpu_custom_call.1} parent=1 // pred_region
      %980 = vsyncadd [#allocation4], 0
      %s981 = sshll.u32 [#allocation5], 4
      %s982 = int_to_ptr.vmem [resolvable:$true] %s981
      %s983 = sshll.u32 %s7, 4
      %s984 = int_to_ptr.hbm [resolvable:$true] %s983
      %989 = dma.vmem_to_hbm [thread:$0]  %s982, 1024, %s984, [#allocation4], 64, 64, 4
    $region37: #{tpu_custom_call.1} parent=1 // pred_fallthru
      _
    // Predicated region
    $region38: #{tpu_custom_call.1} parent=1 // pred_check
      _
    $region39: #{tpu_custom_call.1} parent=1 // pred_check_branch
      %991 = sbr.rel (0) target = $region41
    $region40: #{tpu_custom_call.1} parent=1 // pred_region
      %993 = dma.done [#allocation4], 1024
    $region41: #{tpu_custom_call.1} parent=1 // pred_fallthru
      _
    %994 = vsyncpa [#allocation3], 1
    %995 = vsyncpa [#allocation4], 1

</llo_original>
